<compile_context>
chip_gen: v7x
topology: tpu7x:2x2x1
jax: 0.10.0
libtpu: 0.0.40
codegen_flags: <defaults>
</compile_context>

<pallas_src>
import functools

import jax
import jax.numpy as jnp
from jax.experimental import pallas as pl
from jax.experimental.pallas import tpu as pltpu


# ---------------------------------------------------------------------------
# Parameter / constant construction (plain-JAX glue, computed once)
# ---------------------------------------------------------------------------
def gaussian_weights(sigma: float, kernel_size: int) -> jnp.ndarray:
    half = (kernel_size - 1) / 2.0
    sq = jnp.linspace(-half, half, kernel_size) ** 2
    g = jnp.exp(-0.5 * sq / (sigma ** 2))
    return (g / g.sum()).astype(jnp.float32)  # (K,)


def blur_matrix(weights: jnp.ndarray, n: int, pad: int) -> jnp.ndarray:
    """Dense band matrix T with T[i, j] = w[j - i + pad] (zero-padded conv)."""
    K = weights.shape[0]
    i = jnp.arange(n)[:, None]
    j = jnp.arange(n)[None, :]
    k = j - i + pad
    valid = (k >= 0) & (k < K)
    return jnp.where(valid, weights[jnp.clip(k, 0, K - 1)], 0.0).astype(jnp.float32)


# ---------------------------------------------------------------------------
# Pallas kernel (single lane-dense grid step)
#   u_ref   : (H, L)   VMEM   image, batch+channel packed on lanes, L = B*C*W
#   tv_ref  : (H, H)   VMEM   vertical blur ** reps
#   twt_ref : (L, L)   VMEM   kron(I_{B*C}, (horizontal blur ** reps)^T)
#   sel_ref : (L, L)   VMEM   0/1 matrix broadcasting each batch's mask lanes
#   eps_ref : (1, L)   VMEM   per-(batch, channel) epsilon, lane-aligned
#   o_ref   : (H, L)   VMEM   lane-dense output slab (mask channel included)
# ---------------------------------------------------------------------------
def _inpaint_kernel(u_ref, tv_ref, twt_ref, sel_ref, eps_ref, o_ref):
    u = u_ref[...]                                                     # (H, L)

    # Vertical blur for all batches/channels: one wide MXU matmul.
    v = jnp.dot(tv_ref[...], u, preferred_element_type=jnp.float32)    # (H, L)

    # Horizontal blur via block-diagonal right operand: one MXU matmul,
    # result already lane-ordered (no slicing / concat).
    h = jnp.dot(v, twt_ref[...], preferred_element_type=jnp.float32)   # (H, L)

    # u = u + epsilon  (broadcast the (1, L) lane row over all H rows)
    u_eps = h + eps_ref[...]                                           # (H, L)

    # Denominator = each batch's mask channel broadcast to all its channels,
    # done as an MXU matmul against a 0/1 selection matrix (no lane shuffles).
    den = jnp.dot(u_eps, sel_ref[...], preferred_element_type=jnp.float32)

    # EUP approximate reciprocal + one f32 Newton step (error << 1e-4).
    inv = pl.reciprocal(den, approx=True)
    inv = inv * (2.0 - den * inv)

    o_ref[...] = u_eps * inv


# ---------------------------------------------------------------------------
# Wrapper
# ---------------------------------------------------------------------------
def inpainter_forward(x, m, *, sigma, kernel_size, reps, scale_factor=1):
    assert scale_factor == 1, "only scale_factor=1 (Identity) is implemented"
    x = x.astype(jnp.float32)
    m = m.astype(jnp.float32)
    B, Cx, H, W = x.shape
    assert m.shape == (B, 1, H, W)
    C = Cx + 1
    L = B * C * W

    pad = kernel_size // 2
    g = gaussian_weights(sigma, kernel_size)

    # Fold the `reps` repeated blurs into matrix powers (computed once in XLA).
    tv = jnp.linalg.matrix_power(blur_matrix(g, H, pad), reps)            # (H, H)
    twt = jnp.linalg.matrix_power(blur_matrix(g, W, pad), reps).T         # (W, W)
    # Block-diagonal horizontal operand: one matmul for all batches/channels.
    twt_bd = jnp.kron(jnp.eye(B * C, dtype=jnp.float32), twt)             # (L, L)

    # 0/1 selection matrix: sel[src, dst] = 1 iff src is the mask-channel lane
    # of dst's batch with the same within-row offset.
    idx = jnp.arange(L)
    b_i = idx // (C * W)
    c_i = (idx // W) % C
    w_i = idx % W
    sel = ((b_i[:, None] == b_i[None, :]) &
           (c_i[:, None] == (C - 1)) &
           (w_i[:, None] == w_i[None, :])).astype(jnp.float32)            # (L, L)

    u = jnp.concatenate([x, m], axis=1)                                   # (B, C, H, W)

    # Pre-blur epsilon, laid out along lanes to match the packed image.
    eps = (jnp.sum(u, axis=(2, 3)) * 1e-8).astype(jnp.float32)            # (B, C)
    eps_row = jnp.repeat(eps.reshape(-1), W).reshape(1, L)                # (1, L)

    # Pack batch + channel along lanes: (B, C, H, W) -> (H, B*C*W).
    u2 = jnp.transpose(u, (2, 0, 1, 3)).reshape(H, L)

    # VMEM budget derived from actual block sizes, capped for v7x headroom.
    blk_bytes = 4 * (2 * H * L + H * H + 2 * L * L + L)
    vmem_limit = int(min(48 * 1024 * 1024, 2 * blk_bytes + 4 * 1024 * 1024))

    out_full = pl.pallas_call(
        _inpaint_kernel,
        out_shape=jax.ShapeDtypeStruct((H, L), jnp.float32),
        grid=(1,),
        in_specs=[
            pl.BlockSpec((H, L), lambda i: (0, 0)),
            pl.BlockSpec((H, H), lambda i: (0, 0)),
            pl.BlockSpec((L, L), lambda i: (0, 0)),
            pl.BlockSpec((L, L), lambda i: (0, 0)),
            pl.BlockSpec((1, L), lambda i: (0, 0)),
        ],
        out_specs=pl.BlockSpec((H, L), lambda i: (0, 0)),
        compiler_params=pltpu.CompilerParams(
            dimension_semantics=("arbitrary",),
            vmem_limit_bytes=vmem_limit,
        ),
    )(u2, tv, twt_bd, sel, eps_row)

    # (H, B*C*W) -> (B, C, H, W), drop the mask/mask channel.
    out = jnp.transpose(out_full.reshape(H, B, C, W), (1, 2, 0, 3))
    return out[:, :Cx]


# ---------------------------------------------------------------------------
# Pure-JAX reference (shift-and-add separable conv, reps explicit loop)
# ---------------------------------------------------------------------------
def _ref_gaussian_filter(u, g, pad):
    _, _, H, W = u.shape
    K = g.shape[0]
    up = jnp.pad(u, ((0, 0), (0, 0), (pad, pad), (0, 0)))
    v = sum(g[k] * up[:, :, k:k + H, :] for k in range(K))
    vp = jnp.pad(v, ((0, 0), (0, 0), (0, 0), (pad, pad)))
    h = sum(g[k] * vp[:, :, :, k:k + W] for k in range(K))
    return h


def _ref_forward(x, m, *, sigma, kernel_size, reps):
    pad = kernel_size // 2
    g = gaussian_weights(sigma, kernel_size)
    u = jnp.concatenate([x, m], axis=1)
    eps = jnp.sum(u, axis=(2, 3), keepdims=True) * 1e-8
    for _ in range(reps):
        u = _ref_gaussian_filter(u, g, pad)
    u = u + eps
    return u[:, :-1] / u[:, -1:]


# ---------------------------------------------------------------------------
if __name__ == "__main__":
    B, H, W = 2, 16, 16
    sigma, kernel_size, reps = 1.5, 5, 2

    key = jax.random.PRNGKey(0)
    kx, km = jax.random.split(key)
    x = jax.random.normal(kx, (B, 3, H, W), dtype=jnp.float32)
    # mask-like input, strictly positive so the division is well conditioned
    m = jax.random.uniform(km, (B, 1, H, W), dtype=jnp.float32,
                           minval=0.25, maxval=1.0)

    out = inpainter_forward(x, m, sigma=sigma, kernel_size=kernel_size, reps=reps)
    out = jax.block_until_ready(out)

    ref = _ref_forward(x, m, sigma=sigma, kernel_size=kernel_size, reps=reps)
    ref = jax.block_until_ready(ref)

    assert out.shape == (B, 3, H, W)
    assert jnp.allclose(out, ref, rtol=1e-4, atol=1e-4), (
        f"max abs diff {jnp.max(jnp.abs(out - ref))}")

    print("KERNEL_OK")
</pallas_src>

<mosaic_0001>
module attributes {stable_mosaic.version = 11 : i64} {
  func.func @_inpaint_kernel(%arg0: i32, %arg1: memref<16x128xf32, #tpu.memory_space<vmem>>, %arg2: memref<16x16xf32, #tpu.memory_space<vmem>>, %arg3: memref<128x128xf32, #tpu.memory_space<vmem>>, %arg4: memref<128x128xf32, #tpu.memory_space<vmem>>, %arg5: memref<1x128xf32, #tpu.memory_space<vmem>>, %arg6: memref<16x128xf32, #tpu.memory_space<vmem>>) attributes {dimension_semantics = [#tpu.dimension_semantics<arbitrary>], iteration_bounds = array<i64: 1>, scalar_prefetch = 0 : i64, scratch_operands = 0 : i64, tpu.core_type = #tpu.core_type<tc>, window_params = [{pipeline_mode = #tpu.pipeline_mode<synchronous>, transform_indices = @transform_0, window_bounds = array<i64: 16, 128>}, {pipeline_mode = #tpu.pipeline_mode<synchronous>, transform_indices = @transform_1, window_bounds = array<i64: 16, 16>}, {pipeline_mode = #tpu.pipeline_mode<synchronous>, transform_indices = @transform_2, window_bounds = array<i64: 128, 128>}, {pipeline_mode = #tpu.pipeline_mode<synchronous>, transform_indices = @transform_3, window_bounds = array<i64: 128, 128>}, {pipeline_mode = #tpu.pipeline_mode<synchronous>, transform_indices = @transform_4, window_bounds = array<i64: 1, 128>}, {pipeline_mode = #tpu.pipeline_mode<synchronous>, transform_indices = @transform_5, window_bounds = array<i64: 16, 128>}]} {
    %c0 = arith.constant 0 : index
    %c0_0 = arith.constant 0 : index
    %0 = vector.load %arg1[%c0, %c0_0] : memref<16x128xf32, #tpu.memory_space<vmem>>, vector<16x128xf32>
    %c0_1 = arith.constant 0 : index
    %c0_2 = arith.constant 0 : index
    %1 = vector.load %arg2[%c0_1, %c0_2] : memref<16x16xf32, #tpu.memory_space<vmem>>, vector<16x16xf32>
    %cst = arith.constant dense<0.000000e+00> : vector<16x128xf32>
    %2 = tpu.matmul %1, %0, %cst {dimension_numbers = #tpu.dot_dimension_numbers<[1], [0], [0], [1], [0, 0, 1, 1], [], []>} : vector<16x16xf32>, vector<16x128xf32>, vector<16x128xf32> -> vector<16x128xf32>
    %c0_3 = arith.constant 0 : index
    %c0_4 = arith.constant 0 : index
    %3 = vector.load %arg3[%c0_3, %c0_4] : memref<128x128xf32, #tpu.memory_space<vmem>>, vector<128x128xf32>
    %cst_5 = arith.constant dense<0.000000e+00> : vector<16x128xf32>
    %4 = tpu.matmul %2, %3, %cst_5 {dimension_numbers = #tpu.dot_dimension_numbers<[1], [0], [0], [1], [0, 0, 1, 1], [], []>} : vector<16x128xf32>, vector<128x128xf32>, vector<16x128xf32> -> vector<16x128xf32>
    %c0_6 = arith.constant 0 : index
    %c0_7 = arith.constant 0 : index
    %5 = vector.load %arg5[%c0_6, %c0_7] : memref<1x128xf32, #tpu.memory_space<vmem>>, vector<1x128xf32>
    %6 = vector.broadcast %5 : vector<1x128xf32> to vector<16x128xf32>
    %7 = arith.addf %4, %6 : vector<16x128xf32>
    %c0_8 = arith.constant 0 : index
    %c0_9 = arith.constant 0 : index
    %8 = vector.load %arg4[%c0_8, %c0_9] : memref<128x128xf32, #tpu.memory_space<vmem>>, vector<128x128xf32>
    %cst_10 = arith.constant dense<0.000000e+00> : vector<16x128xf32>
    %9 = tpu.matmul %7, %8, %cst_10 {dimension_numbers = #tpu.dot_dimension_numbers<[1], [0], [0], [1], [0, 0, 1, 1], [], []>} : vector<16x128xf32>, vector<128x128xf32>, vector<16x128xf32> -> vector<16x128xf32>
    %10 = tpu.reciprocal %9 {approx = true} : vector<16x128xf32> -> vector<16x128xf32>
    %11 = arith.mulf %9, %10 : vector<16x128xf32>
    %cst_11 = arith.constant 2.000000e+00 : f32
    %12 = vector.broadcast %cst_11 : f32 to vector<16x128xf32>
    %13 = arith.subf %12, %11 : vector<16x128xf32>
    %14 = arith.mulf %10, %13 : vector<16x128xf32>
    %15 = arith.mulf %7, %14 : vector<16x128xf32>
    %c0_12 = arith.constant 0 : index
    %c0_13 = arith.constant 0 : index
    %16 = vector.load %arg6[%c0_12, %c0_13] : memref<16x128xf32, #tpu.memory_space<vmem>>, vector<16x128xf32>
    tpu.vector_store %arg6[%c0_12, %c0_13], %15 {strides = array<i32>} : memref<16x128xf32, #tpu.memory_space<vmem>>, vector<16x128xf32>,
    return
  }
  func.func @transform_0(%arg0: i32) -> (i32, i32) {
    %c0_i32 = arith.constant 0 : i32
    %c0_i32_0 = arith.constant 0 : i32
    %c0_i32_1 = arith.constant 0 : i32
    return %c0_i32, %c0_i32_0 : i32, i32
  }
  func.func @transform_1(%arg0: i32) -> (i32, i32) {
    %c0_i32 = arith.constant 0 : i32
    %c0_i32_0 = arith.constant 0 : i32
    %c0_i32_1 = arith.constant 0 : i32
    return %c0_i32, %c0_i32_0 : i32, i32
  }
  func.func @transform_2(%arg0: i32) -> (i32, i32) {
    %c0_i32 = arith.constant 0 : i32
    %c0_i32_0 = arith.constant 0 : i32
    %c0_i32_1 = arith.constant 0 : i32
    return %c0_i32, %c0_i32_0 : i32, i32
  }
  func.func @transform_3(%arg0: i32) -> (i32, i32) {
    %c0_i32 = arith.constant 0 : i32
    %c0_i32_0 = arith.constant 0 : i32
    %c0_i32_1 = arith.constant 0 : i32
    return %c0_i32, %c0_i32_0 : i32, i32
  }
  func.func @transform_4(%arg0: i32) -> (i32, i32) {
    %c0_i32 = arith.constant 0 : i32
    %c0_i32_0 = arith.constant 0 : i32
    %c0_i32_1 = arith.constant 0 : i32
    return %c0_i32, %c0_i32_0 : i32, i32
  }
  func.func @transform_5(%arg0: i32) -> (i32, i32) {
    %c0_i32 = arith.constant 0 : i32
    %c0_i32_0 = arith.constant 0 : i32
    %c0_i32_1 = arith.constant 0 : i32
    return %c0_i32, %c0_i32_0 : i32, i32
  }
}

</mosaic_0001>

<llo_original>
// kernel: tpu_custom_call.1
$region0: #{tpu_custom_call.1}
  #allocation0 [shape = 'u32[]', space=smem, size = 0x4, offset = 0x4, fixed_abs, tag = 'smem constant byte address 0x4 - core index']
  #allocation1 [shape = 'u32[144,128]{1,0:T(1,128)}', space=vmem, size = 0x12000, scoped, tag = 'internal scratch']
  %s0 = inlined_call_operand.hbm [shape: f32[16,128], index: 0, kind: input, shape index: {}]
  %s1 = inlined_call_operand.hbm [shape: f32[16,16], index: 1, kind: input, shape index: {}]
  %s2 = inlined_call_operand.hbm [shape: f32[128,128], index: 2, kind: input, shape index: {}]
  %s3 = inlined_call_operand.hbm [shape: f32[128,128], index: 3, kind: input, shape index: {}]
  %s4 = inlined_call_operand.vmem [shape: f32[1,128], index: 4, kind: input, shape index: {}]
  %s5 = inlined_call_operand.hbm [shape: f32[16,128], index: 5, kind: output, shape index: {}]
  %s6 = sld [smem:[#allocation0]]
  $region46: #{tpu_custom_call.1} parent=0
    _
  %s8 = ssub.s32 1, %s6
  %s9 = scalar_select 0, %s8, %s6
  $region1: #{tpu_custom_call.1} parent=0
    #allocation2 [shape = 'u8[8192]{0}', space=vmem, size = 0x2000, scoped, tag = 'input window, operand 0, single buffered']
    #allocation3 [shape = 's32[1]{0}', space=sflag, size = 0x4, scoped, tag = 'scoped memory for tpu_custom_call.1']
    #allocation4 [shape = 's32[1]{0}', space=sflag, size = 0x4, scoped, tag = 'scoped memory for tpu_custom_call.1']
    #allocation5 [shape = 'u8[8192]{0}', space=vmem, size = 0x2000, scoped, tag = 'input window, operand 1, single buffered']
    #allocation6 [shape = 's32[1]{0}', space=sflag, size = 0x4, scoped, tag = 'scoped memory for tpu_custom_call.1']
    #allocation7 [shape = 'u8[65536]{0}', space=vmem, size = 0x10000, scoped, tag = 'input window, operand 2, single buffered']
    #allocation8 [shape = 'u8[65536]{0}', space=vmem, size = 0x10000, scoped, tag = 'input window, operand 3, single buffered']
    #allocation9 [shape = 's32[1]{0}', space=sflag, size = 0x4, scoped, tag = 'scoped memory for tpu_custom_call.1']
    #allocation10 [shape = 'u8[8192]{0}', space=vmem, size = 0x2000, scoped, tag = 'output window, operand 0, single buffered']
    %10 = vsyncpa [#allocation3], 0
    %11 = vsyncpa [#allocation6], 0
    %12 = vsyncpa [#allocation9], 0
    %13 = vsyncpa [#allocation4], 0
    // Predicated region
    $region2: #{tpu_custom_call.1} parent=1 // pred_check
      _
    $region3: #{tpu_custom_call.1} parent=1 // pred_check_branch
      %15 = sbr.rel (0) target = $region5
    $region4: #{tpu_custom_call.1} parent=1 // pred_region
      %s17 = ssub.s32 256, 256
      %18 = vsyncadd [#allocation3], %s17
      %s19 = sshll.u32 [#allocation2], 4
      %s20 = int_to_ptr.vmem [resolvable:$true] %s19
      %25 = dma.hbm_to_vmem [thread:$0]  %s0, 256, %s20, [#allocation3], 128, 128, 8
    $region5: #{tpu_custom_call.1} parent=1 // pred_fallthru
      _
    // Predicated region
    $region6: #{tpu_custom_call.1} parent=1 // pred_check
      _
    $region7: #{tpu_custom_call.1} parent=1 // pred_check_branch
      %27 = sbr.rel (0) target = $region9
    $region8: #{tpu_custom_call.1} parent=1 // pred_region
      %s29 = ssub.s32 256, 256
      %30 = vsyncadd [#allocation6], %s29
      %s31 = sshll.u32 [#allocation5], 4
      %s32 = int_to_ptr.vmem [resolvable:$true] %s31
      %37 = dma.hbm_to_vmem [thread:$0]  %s1, 256, %s32, [#allocation6], 128, 128, 8
    $region9: #{tpu_custom_call.1} parent=1 // pred_fallthru
      _
    // Predicated region
    $region10: #{tpu_custom_call.1} parent=1 // pred_check
      _
    $region11: #{tpu_custom_call.1} parent=1 // pred_check_branch
      %39 = sbr.rel (0) target = $region13
    $region12: #{tpu_custom_call.1} parent=1 // pred_region
      %s41 = ssub.s32 2048, 2048
      %42 = vsyncadd [#allocation6], %s41
      %s43 = sshll.u32 [#allocation7], 4
      %s44 = int_to_ptr.vmem [resolvable:$true] %s43
      %49 = dma.hbm_to_vmem [thread:$0]  %s2, 2048, %s44, [#allocation6], 128, 128, 8
    $region13: #{tpu_custom_call.1} parent=1 // pred_fallthru
      _
    // Predicated region
    $region14: #{tpu_custom_call.1} parent=1 // pred_check
      _
    $region15: #{tpu_custom_call.1} parent=1 // pred_check_branch
      %51 = sbr.rel (0) target = $region17
    $region16: #{tpu_custom_call.1} parent=1 // pred_region
      %s53 = ssub.s32 2048, 2048
      %54 = vsyncadd [#allocation9], %s53
      %s55 = sshll.u32 [#allocation8], 4
      %s56 = int_to_ptr.vmem [resolvable:$true] %s55
      %61 = dma.hbm_to_vmem [thread:$0]  %s3, 2048, %s56, [#allocation9], 128, 128, 8
    $region17: #{tpu_custom_call.1} parent=1 // pred_fallthru
      _
    // Predicated region
    $region18: #{tpu_custom_call.1} parent=1 // pred_check
      _
    $region19: #{tpu_custom_call.1} parent=1 // pred_check_branch
      %63 = sbr.rel (0) target = $region21
    $region20: #{tpu_custom_call.1} parent=1 // pred_region
      _
    $region21: #{tpu_custom_call.1} parent=1 // pred_fallthru
      _
    // Predicated region
    $region22: #{tpu_custom_call.1} parent=1 // pred_check
      _
    $region23: #{tpu_custom_call.1} parent=1 // pred_check_branch
      %65 = sbr.rel (0) target = $region25
    $region24: #{tpu_custom_call.1} parent=1 // pred_region
      %66 = dma.done [#allocation3], 256
    $region25: #{tpu_custom_call.1} parent=1 // pred_fallthru
      _
    // Predicated region
    $region26: #{tpu_custom_call.1} parent=1 // pred_check
      _
    $region27: #{tpu_custom_call.1} parent=1 // pred_check_branch
      %68 = sbr.rel (0) target = $region29
    $region28: #{tpu_custom_call.1} parent=1 // pred_region
      %69 = dma.done [#allocation6], 256
    $region29: #{tpu_custom_call.1} parent=1 // pred_fallthru
      _
    // Predicated region
    $region30: #{tpu_custom_call.1} parent=1 // pred_check
      _
    $region31: #{tpu_custom_call.1} parent=1 // pred_check_branch
      %71 = sbr.rel (0) target = $region33
    $region32: #{tpu_custom_call.1} parent=1 // pred_region
      %72 = dma.done [#allocation6], 2048
    $region33: #{tpu_custom_call.1} parent=1 // pred_fallthru
      _
    // Predicated region
    $region34: #{tpu_custom_call.1} parent=1 // pred_check
      _
    $region35: #{tpu_custom_call.1} parent=1 // pred_check_branch
      %74 = sbr.rel (0) target = $region37
    $region36: #{tpu_custom_call.1} parent=1 // pred_region
      %75 = dma.done [#allocation9], 2048
    $region37: #{tpu_custom_call.1} parent=1 // pred_fallthru
      _
    %v76 = vld [vmem:[#allocation2] sm:$0xff]
    %v77 = vld [vmem:[#allocation2 + $0x8] sm:$0xff]
    %v78 = vld [vmem:[#allocation5] sm:$0xff]
    %v79 = vld [vmem:[#allocation5 + $0x8] sm:$0xff]
    %vm80 = vcmask 130048
    %v82 = vsel %vm80, %v78, 0
    %v85 = vsel %vm80, %v79, 0
    %87 = vmatprep.subr.mxu0 0.0
    %88 = vmatpush1.msra.mxu0 %v76
    %89 = vmatprep.subr.mxu0 0.0
    %90 = vmatpush1.msra.mxu0 %v77
    %91 = vmatprep.subr.mxu0 0.0
    %92 = vmatpush1.msra.mxu0 0.0
    %93 = vmatprep.subr.mxu0 0.0
    %94 = vmatpush1.msra.mxu0 0.0
    %95 = vmatprep.subr.mxu0 0.0
    %96 = vmatpush1.msra.mxu0 0.0
    %97 = vmatprep.subr.mxu0 0.0
    %98 = vmatpush1.msra.mxu0 0.0
    %99 = vmatprep.subr.mxu0 0.0
    %100 = vmatpush1.msra.mxu0 0.0
    %101 = vmatprep.subr.mxu0 0.0
    %102 = vmatpush1.msra.mxu0 0.0
    %103 = vmatprep.subr.mxu0 0.0
    %104 = vmatpush1.msra.mxu0 0.0
    %105 = vmatprep.subr.mxu0 0.0
    %106 = vmatpush1.msra.mxu0 0.0
    %107 = vmatprep.subr.mxu0 0.0
    %108 = vmatpush1.msra.mxu0 0.0
    %109 = vmatprep.subr.mxu0 0.0
    %110 = vmatpush1.msra.mxu0 0.0
    %111 = vmatprep.subr.mxu0 0.0
    %112 = vmatpush1.msra.mxu0 0.0
    %113 = vmatprep.subr.mxu0 0.0
    %114 = vmatpush1.msra.mxu0 0.0
    %115 = vmatprep.subr.mxu0 0.0
    %116 = vmatpush1.msra.mxu0 0.0
    %117 = vmatprep.subr.mxu0 0.0
    %118 = vmatpush1.msra.mxu0 0.0
    %119 = vmatprep.subr.mxu0 0.0
    %120 = vmatpush1.msra.mxu0 0.0
    %121 = vmatprep.subr.mxu0 0.0
    %122 = vmatpush1.msra.mxu0 0.0
    %123 = vmatprep.subr.mxu0 0.0
    %124 = vmatpush1.msra.mxu0 0.0
    %125 = vmatprep.subr.mxu0 0.0
    %126 = vmatpush1.msra.mxu0 0.0
    %127 = vmatprep.subr.mxu0 0.0
    %128 = vmatpush1.msra.mxu0 0.0
    %129 = vmatprep.subr.mxu0 0.0
    %130 = vmatpush1.msra.mxu0 0.0
    %131 = vmatprep.subr.mxu0 0.0
    %132 = vmatpush1.msra.mxu0 0.0
    %133 = vmatprep.subr.mxu0 0.0
    %134 = vmatpush1.msra.mxu0 0.0
    %135 = vmatprep.subr.mxu0 0.0
    %136 = vmatpush1.msra.mxu0 0.0
    %137 = vmatprep.subr.mxu0 0.0
    %138 = vmatpush1.msra.mxu0 0.0
    %139 = vmatprep.subr.mxu0 0.0
    %140 = vmatpush1.msra.mxu0 0.0
    %141 = vmatprep.subr.mxu0 0.0
    %142 = vmatpush1.msra.mxu0 0.0
    %143 = vmatprep.subr.mxu0 0.0
    %144 = vmatpush1.msra.mxu0 0.0
    %145 = vmatprep.subr.mxu0 0.0
    %146 = vmatpush1.msra.mxu0 0.0
    %147 = vmatprep.subr.mxu0 0.0
    %148 = vmatpush1.msra.mxu0 0.0
    %149 = vmatprep.subr.mxu0 0.0
    %150 = vmatpush1.msra.mxu0 0.0
    %151 = vmatprep.mubr.f32.mxu0 0.0
    %152 = vmatmul.mubr.f32.gmra.mrb[0].mxu0 %v82
    %v153 = vpop.f32.mrb[0].mxu0
    %v154 = vadd.f32 0.0, %v153
    %v155 = vpop.f32.mrb[0].mxu0
    %156 = vmatprep.mubr.f32.mxu0 0.0
    %157 = vmatmul.mubr.f32.gmra.mrb[0].mxu0 %v85
    %v158 = vpop.f32.mrb[0].mxu0
    %v159 = vadd.f32 0.0, %v158
    %v160 = vpop.f32.mrb[0].mxu0
    %161 = vdwg.mxu0
    %v162 = vld [vmem:[#allocation7] sm:$0xff]
    %v163 = vld [vmem:[#allocation7 + $0x8] sm:$0xff]
    %v164 = vld [vmem:[#allocation7 + $0x10] sm:$0xff]
    %v165 = vld [vmem:[#allocation7 + $0x18] sm:$0xff]
    %v166 = vld [vmem:[#allocation7 + $0x20] sm:$0xff]
    %v167 = vld [vmem:[#allocation7 + $0x28] sm:$0xff]
    %v168 = vld [vmem:[#allocation7 + $0x30] sm:$0xff]
    %v169 = vld [vmem:[#allocation7 + $0x38] sm:$0xff]
    %v170 = vld [vmem:[#allocation7 + $0x40] sm:$0xff]
    %v171 = vld [vmem:[#allocation7 + $0x48] sm:$0xff]
    %v172 = vld [vmem:[#allocation7 + $0x50] sm:$0xff]
    %v173 = vld [vmem:[#allocation7 + $0x58] sm:$0xff]
    %v174 = vld [vmem:[#allocation7 + $0x60] sm:$0xff]
    %v175 = vld [vmem:[#allocation7 + $0x68] sm:$0xff]
    %v176 = vld [vmem:[#allocation7 + $0x70] sm:$0xff]
    %v177 = vld [vmem:[#allocation7 + $0x78] sm:$0xff]
    %v178 = vld [vmem:[%s4] sm:$0x1]
    %v180 = vlaneseq
    %v181 = vshrl.u32 %v180, 7
    %v182 = vsub.s32 0, %v181
    %v183 = vrot.slane %v178, %v182
    %185 = vmatprep.subr.mxu0 0.0
    %186 = vmatpush1.msra.mxu0 %v162
    %187 = vmatprep.subr.mxu0 0.0
    %188 = vmatpush1.msra.mxu0 %v163
    %189 = vmatprep.subr.mxu0 0.0
    %190 = vmatpush1.msra.mxu0 %v164
    %191 = vmatprep.subr.mxu0 0.0
    %192 = vmatpush1.msra.mxu0 %v165
    %193 = vmatprep.subr.mxu0 0.0
    %194 = vmatpush1.msra.mxu0 %v166
    %195 = vmatprep.subr.mxu0 0.0
    %196 = vmatpush1.msra.mxu0 %v167
    %197 = vmatprep.subr.mxu0 0.0
    %198 = vmatpush1.msra.mxu0 %v168
    %199 = vmatprep.subr.mxu0 0.0
    %200 = vmatpush1.msra.mxu0 %v169
    %201 = vmatprep.subr.mxu0 0.0
    %202 = vmatpush1.msra.mxu0 %v170
    %203 = vmatprep.subr.mxu0 0.0
    %204 = vmatpush1.msra.mxu0 %v171
    %205 = vmatprep.subr.mxu0 0.0
    %206 = vmatpush1.msra.mxu0 %v172
    %207 = vmatprep.subr.mxu0 0.0
    %208 = vmatpush1.msra.mxu0 %v173
    %209 = vmatprep.subr.mxu0 0.0
    %210 = vmatpush1.msra.mxu0 %v174
    %211 = vmatprep.subr.mxu0 0.0
    %212 = vmatpush1.msra.mxu0 %v175
    %213 = vmatprep.subr.mxu0 0.0
    %214 = vmatpush1.msra.mxu0 %v176
    %215 = vmatprep.subr.mxu0 0.0
    %216 = vmatpush1.msra.mxu0 %v177
    %217 = vmatprep.subr.mxu0 0.0
    %218 = vmatpush1.msra.mxu0 0.0
    %219 = vmatprep.subr.mxu0 0.0
    %220 = vmatpush1.msra.mxu0 0.0
    %221 = vmatprep.subr.mxu0 0.0
    %222 = vmatpush1.msra.mxu0 0.0
    %223 = vmatprep.subr.mxu0 0.0
    %224 = vmatpush1.msra.mxu0 0.0
    %225 = vmatprep.subr.mxu0 0.0
    %226 = vmatpush1.msra.mxu0 0.0
    %227 = vmatprep.subr.mxu0 0.0
    %228 = vmatpush1.msra.mxu0 0.0
    %229 = vmatprep.subr.mxu0 0.0
    %230 = vmatpush1.msra.mxu0 0.0
    %231 = vmatprep.subr.mxu0 0.0
    %232 = vmatpush1.msra.mxu0 0.0
    %233 = vmatprep.subr.mxu0 0.0
    %234 = vmatpush1.msra.mxu0 0.0
    %235 = vmatprep.subr.mxu0 0.0
    %236 = vmatpush1.msra.mxu0 0.0
    %237 = vmatprep.subr.mxu0 0.0
    %238 = vmatpush1.msra.mxu0 0.0
    %239 = vmatprep.subr.mxu0 0.0
    %240 = vmatpush1.msra.mxu0 0.0
    %241 = vmatprep.subr.mxu0 0.0
    %242 = vmatpush1.msra.mxu0 0.0
    %243 = vmatprep.subr.mxu0 0.0
    %244 = vmatpush1.msra.mxu0 0.0
    %245 = vmatprep.subr.mxu0 0.0
    %246 = vmatpush1.msra.mxu0 0.0
    %247 = vmatprep.subr.mxu0 0.0
    %248 = vmatpush1.msra.mxu0 0.0
    %249 = vmatprep.mubr.f32.mxu0 0.0
    %250 = vmatmul.mubr.f32.gmra.mrb[0].mxu0 %v154
    %v251 = vpop.f32.mrb[0].mxu0
    %v252 = vadd.f32 %v183, %v251
    %v253 = vpop.f32.mrb[0].mxu0
    %254 = vmatprep.mubr.f32.mxu0 0.0
    %255 = vmatmul.mubr.f32.gmra.mrb[0].mxu0 %v159
    %v256 = vpop.f32.mrb[0].mxu0
    %v257 = vadd.f32 %v183, %v256
    %v258 = vpop.f32.mrb[0].mxu0
    %259 = vdwg.mxu0
    %v260 = vld [vmem:[#allocation8] sm:$0xff]
    %v261 = vld [vmem:[#allocation8 + $0x8] sm:$0xff]
    %v262 = vld [vmem:[#allocation8 + $0x10] sm:$0xff]
    %v263 = vld [vmem:[#allocation8 + $0x18] sm:$0xff]
    %v264 = vld [vmem:[#allocation8 + $0x20] sm:$0xff]
    %v265 = vld [vmem:[#allocation8 + $0x28] sm:$0xff]
    %v266 = vld [vmem:[#allocation8 + $0x30] sm:$0xff]
    %v267 = vld [vmem:[#allocation8 + $0x38] sm:$0xff]
    %v268 = vld [vmem:[#allocation8 + $0x40] sm:$0xff]
    %v269 = vld [vmem:[#allocation8 + $0x48] sm:$0xff]
    %v270 = vld [vmem:[#allocation8 + $0x50] sm:$0xff]
    %v271 = vld [vmem:[#allocation8 + $0x58] sm:$0xff]
    %v272 = vld [vmem:[#allocation8 + $0x60] sm:$0xff]
    %v273 = vld [vmem:[#allocation8 + $0x68] sm:$0xff]
    %v274 = vld [vmem:[#allocation8 + $0x70] sm:$0xff]
    %v275 = vld [vmem:[#allocation8 + $0x78] sm:$0xff]
    %276 = vmatprep.subr.mxu0 0.0
    %277 = vmatpush1.msra.mxu0 %v260
    %278 = vmatprep.subr.mxu0 0.0
    %279 = vmatpush1.msra.mxu0 %v261
    %280 = vmatprep.subr.mxu0 0.0
    %281 = vmatpush1.msra.mxu0 %v262
    %282 = vmatprep.subr.mxu0 0.0
    %283 = vmatpush1.msra.mxu0 %v263
    %284 = vmatprep.subr.mxu0 0.0
    %285 = vmatpush1.msra.mxu0 %v264
    %286 = vmatprep.subr.mxu0 0.0
    %287 = vmatpush1.msra.mxu0 %v265
    %288 = vmatprep.subr.mxu0 0.0
    %289 = vmatpush1.msra.mxu0 %v266
    %290 = vmatprep.subr.mxu0 0.0
    %291 = vmatpush1.msra.mxu0 %v267
    %292 = vmatprep.subr.mxu0 0.0
    %293 = vmatpush1.msra.mxu0 %v268
    %294 = vmatprep.subr.mxu0 0.0
    %295 = vmatpush1.msra.mxu0 %v269
    %296 = vmatprep.subr.mxu0 0.0
    %297 = vmatpush1.msra.mxu0 %v270
    %298 = vmatprep.subr.mxu0 0.0
    %299 = vmatpush1.msra.mxu0 %v271
    %300 = vmatprep.subr.mxu0 0.0
    %301 = vmatpush1.msra.mxu0 %v272
    %302 = vmatprep.subr.mxu0 0.0
    %303 = vmatpush1.msra.mxu0 %v273
    %304 = vmatprep.subr.mxu0 0.0
    %305 = vmatpush1.msra.mxu0 %v274
    %306 = vmatprep.subr.mxu0 0.0
    %307 = vmatpush1.msra.mxu0 %v275
    %308 = vmatprep.subr.mxu0 0.0
    %309 = vmatpush1.msra.mxu0 0.0
    %310 = vmatprep.subr.mxu0 0.0
    %311 = vmatpush1.msra.mxu0 0.0
    %312 = vmatprep.subr.mxu0 0.0
    %313 = vmatpush1.msra.mxu0 0.0
    %314 = vmatprep.subr.mxu0 0.0
    %315 = vmatpush1.msra.mxu0 0.0
    %316 = vmatprep.subr.mxu0 0.0
    %317 = vmatpush1.msra.mxu0 0.0
    %318 = vmatprep.subr.mxu0 0.0
    %319 = vmatpush1.msra.mxu0 0.0
    %320 = vmatprep.subr.mxu0 0.0
    %321 = vmatpush1.msra.mxu0 0.0
    %322 = vmatprep.subr.mxu0 0.0
    %323 = vmatpush1.msra.mxu0 0.0
    %324 = vmatprep.subr.mxu0 0.0
    %325 = vmatpush1.msra.mxu0 0.0
    %326 = vmatprep.subr.mxu0 0.0
    %327 = vmatpush1.msra.mxu0 0.0
    %328 = vmatprep.subr.mxu0 0.0
    %329 = vmatpush1.msra.mxu0 0.0
    %330 = vmatprep.subr.mxu0 0.0
    %331 = vmatpush1.msra.mxu0 0.0
    %332 = vmatprep.subr.mxu0 0.0
    %333 = vmatpush1.msra.mxu0 0.0
    %334 = vmatprep.subr.mxu0 0.0
    %335 = vmatpush1.msra.mxu0 0.0
    %336 = vmatprep.subr.mxu0 0.0
    %337 = vmatpush1.msra.mxu0 0.0
    %338 = vmatprep.subr.mxu0 0.0
    %339 = vmatpush1.msra.mxu0 0.0
    %340 = vmatprep.mubr.f32.mxu0 0.0
    %341 = vmatmul.mubr.f32.gmra.mrb[0].mxu0 %v252
    %v342 = vpop.f32.mrb[0].mxu0
    %v343 = vadd.f32 0.0, %v342
    %v344 = vpop.f32.mrb[0].mxu0
    %345 = vmatprep.mubr.f32.mxu0 0.0
    %346 = vmatmul.mubr.f32.gmra.mrb[0].mxu0 %v257
    %v347 = vpop.f32.mrb[0].mxu0
    %v348 = vadd.f32 0.0, %v347
    %v349 = vpop.f32.mrb[0].mxu0
    %350 = vdwg.mxu0
    %v351 = vrcp.pop %v343
    %v352 = vrcp.pop %v348
    %v353 = vmul.f32 %v343, %v351
    %v354 = vmul.f32 %v348, %v352
    %v355 = vsub.f32 2.0, %v353
    %v356 = vsub.f32 2.0, %v354
    %v357 = vmul.f32 %v351, %v355
    %v358 = vmul.f32 %v352, %v356
    %v359 = vmul.f32 %v252, %v357
    %v360 = vmul.f32 %v257, %v358
    %361 = vst [vmem:[#allocation10] sm:$0xff] %v359
    %362 = vst [vmem:[#allocation10 + $0x8] sm:$0xff] %v360
    // Predicated region
    $region38: #{tpu_custom_call.1} parent=1 // pred_check
      _
    $region39: #{tpu_custom_call.1} parent=1 // pred_check_branch
      %364 = sbr.rel (0) target = $region41
    $region40: #{tpu_custom_call.1} parent=1 // pred_region
      %s366 = ssub.s32 256, 256
      %367 = vsyncadd [#allocation4], %s366
      %s368 = sshll.u32 [#allocation10], 4
      %s369 = int_to_ptr.vmem [resolvable:$true] %s368
      %374 = dma.vmem_to_hbm [thread:$0]  %s369, 256, %s5, [#allocation4], 128, 128, 8
    $region41: #{tpu_custom_call.1} parent=1 // pred_fallthru
      _
    // Predicated region
    $region42: #{tpu_custom_call.1} parent=1 // pred_check
      _
    $region43: #{tpu_custom_call.1} parent=1 // pred_check_branch
      %376 = sbr.rel (0) target = $region45
    $region44: #{tpu_custom_call.1} parent=1 // pred_region
      %377 = dma.done [#allocation4], 256
    $region45: #{tpu_custom_call.1} parent=1 // pred_fallthru
      _
    %378 = vsyncpa [#allocation3], 1
    %379 = vsyncpa [#allocation6], 1
    %380 = vsyncpa [#allocation9], 1
    %381 = vsyncpa [#allocation4], 1

</llo_original>
